<compile_context>
chip_gen: v6e
topology: v6e:2x2x1
jax: 0.10.0
libtpu: 0.0.40
codegen_flags: <defaults>
</compile_context>

<pallas_src>
import math

import jax
import jax.numpy as jnp
from jax.experimental import pallas as pl
from jax.experimental.pallas import tpu as pltpu


def _round_up(x, m):
    return ((x + m - 1) // m) * m


# -----------------------------------------------------------------------------
# Pallas kernel: full fused forward pass for one batch tile.
# -----------------------------------------------------------------------------
def _nrde_kernel(
    x_ref,            # (TB, C_in)            f32
    w1_ref, b1_ref,   # shared layer 1: (C_in, H1) mm_dtype, (1, H1) f32
    w2_ref, b2_ref,   # shared layer 2: (H1, H2)   mm_dtype, (1, H2) f32
    wh1_ref, bh1_ref, # fused head L1: (H2, 2*half) mm_dtype, (1, 2*half) f32
    wh2_ref, bh2_ref, # fused head L2 (block-diag): (2*half, 2) mm_dtype, (1, 2) f32
    out_ref,          # (TB, 2) f32
):
    mm_dtype = w1_ref.dtype

    x = x_ref[...].astype(mm_dtype)

    # Shared trunk: Linear -> Tanh -> (Dropout: identity in eval) x2
    h = jnp.tanh(
        jnp.dot(x, w1_ref[...], preferred_element_type=jnp.float32) + b1_ref[...]
    )
    h = jnp.tanh(
        jnp.dot(h.astype(mm_dtype), w2_ref[...], preferred_element_type=jnp.float32)
        + b2_ref[...]
    )

    # Both heads' first Linear+Tanh fused into one matmul.
    g = jnp.tanh(
        jnp.dot(h.astype(mm_dtype), wh1_ref[...], preferred_element_type=jnp.float32)
        + bh1_ref[...]
    )

    # Both heads' second Linear fused via a block-diagonal weight -> (TB, 2)
    # directly; no jnp.concatenate needed.
    out = (
        jnp.dot(g.astype(mm_dtype), wh2_ref[...], preferred_element_type=jnp.float32)
        + bh2_ref[...]
    )

    # torch.where(isfinite, out, 0)
    out_ref[...] = jnp.where(jnp.isfinite(out), out, jnp.zeros_like(out))


# -----------------------------------------------------------------------------
# Wrapper
# -----------------------------------------------------------------------------
def multitarget_nrde_forward(
    logsig, params, *, batch_tile=256, matmul_dtype=jnp.bfloat16
):
    """Forward pass.  logsig: (B, input_channels) float32.  Returns (B, 2)."""
    B, C = logsig.shape

    (w1, b1), (w2, b2) = params["shared"]
    (wf1, bf1), (wf2, bf2) = params["frustration"]
    (wc1, bc1), (wc2, bc2) = params["cognitive"]

    H1 = w1.shape[1]
    H2 = w2.shape[1]
    half = wf1.shape[1]

    # ---- Fuse the two heads (done once in the wrapper, amortized by jit) ----
    wh1 = jnp.concatenate([wf1, wc1], axis=1)          # (H2, 2*half)
    bh1 = jnp.concatenate([bf1, bc1], axis=1)          # (1, 2*half)
    wh2 = jnp.zeros((2 * half, 2), jnp.float32)
    wh2 = wh2.at[:half, 0:1].set(wf2).at[half:, 1:2].set(wc2)  # block-diagonal
    bh2 = jnp.concatenate([bf2, bc2], axis=1)          # (1, 2)

    # Weights go to the MXU dtype; biases stay f32 (added after f32 accumulate).
    mm = jnp.dtype(matmul_dtype)
    w1c, w2c, wh1c, wh2c = (w.astype(mm) for w in (w1, w2, wh1, wh2))

    # ---- Batch tiling: dtype-aware sublane multiple, pad B as needed --------
    sublane = 32 // mm.itemsize          # 8 for f32, 16 for bf16
    TB = max(sublane, _round_up(min(batch_tile, B), sublane))
    B_pad = _round_up(B, TB)
    x = logsig
    if B_pad != B:
        x = jnp.pad(x, ((0, B_pad - B), (0, 0)))

    weight_args = (w1c, b1, w2c, b2, wh1c, bh1, wh2c, bh2)

    def full_spec(arr):
        # Whole-array block with a constant index_map: stays VMEM-resident.
        return pl.BlockSpec(arr.shape, lambda i: (0,) * arr.ndim)

    flops = 2 * B_pad * (C * H1 + H1 * H2 + H2 * (2 * half) + (2 * half) * 2)
    transcendentals = B_pad * (H1 + H2 + 2 * half)
    bytes_accessed = (
        x.size * x.dtype.itemsize
        + B_pad * 2 * 4
        + sum(int(a.size) * a.dtype.itemsize for a in weight_args)
    )

    out = pl.pallas_call(
        _nrde_kernel,
        out_shape=jax.ShapeDtypeStruct((B_pad, 2), jnp.float32),
        grid_spec=pltpu.PrefetchScalarGridSpec(
            num_scalar_prefetch=0,
            grid=(B_pad // TB,),
            in_specs=[pl.BlockSpec((TB, C), lambda i: (i, 0))]
            + [full_spec(a) for a in weight_args],
            out_specs=pl.BlockSpec((TB, 2), lambda i: (i, 0)),
        ),
        compiler_params=pltpu.CompilerParams(
            dimension_semantics=("parallel",)
        ),
        cost_estimate=pl.CostEstimate(
            flops=int(flops),
            transcendentals=int(transcendentals),
            bytes_accessed=int(bytes_accessed),
        ),
    )(x, *weight_args)
    return out[:B]


# -----------------------------------------------------------------------------
# Deterministic parameter initialization (matches PyTorch __init__ shapes):
#   xavier_normal_(weight, gain=0.1), bias = 0.
# Weights are stored already transposed to (in_features, out_features).
# -----------------------------------------------------------------------------
def _xavier_normal(key, fan_in, fan_out, gain=0.1):
    std = gain * math.sqrt(2.0 / (fan_in + fan_out))
    return std * jax.random.normal(key, (fan_in, fan_out), dtype=jnp.float32)


def init_params(key, input_channels, hidden_dims):
    keys = jax.random.split(key, 16)
    k_iter = iter(keys)

    def linear(fan_in, fan_out):
        w = _xavier_normal(next(k_iter), fan_in, fan_out)
        b = jnp.zeros((1, fan_out), dtype=jnp.float32)
        return w, b

    shared = []
    in_dim = input_channels
    for h_dim in hidden_dims:
        shared.append(linear(in_dim, h_dim))
        in_dim = h_dim

    half = in_dim // 2
    frustration = [linear(in_dim, half), linear(half, 1)]
    cognitive = [linear(in_dim, half), linear(half, 1)]
    return {"shared": shared, "frustration": frustration, "cognitive": cognitive}


# -----------------------------------------------------------------------------
# Pure-JAX reference (un-fused, exactly mirrors the PyTorch forward).
# -----------------------------------------------------------------------------
def reference_forward(logsig, params):
    (w1, b1), (w2, b2) = params["shared"]
    (wf1, bf1), (wf2, bf2) = params["frustration"]
    (wc1, bc1), (wc2, bc2) = params["cognitive"]
    h = jnp.tanh(logsig @ w1 + b1)
    h = jnp.tanh(h @ w2 + b2)
    f = jnp.tanh(h @ wf1 + bf1) @ wf2 + bf2
    c = jnp.tanh(h @ wc1 + bc1) @ wc2 + bc2
    out = jnp.concatenate([f, c], axis=1)
    return jnp.where(jnp.isfinite(out), out, jnp.zeros_like(out))


if __name__ == "__main__":
    key = jax.random.PRNGKey(0)
    k_params, k_x = jax.random.split(key)

    # Small shapes consistent with the module: logsignature features -> MLP.
    batch = 8
    input_channels = 32
    hidden_dims = [64, 64]

    params = init_params(k_params, input_channels, hidden_dims)
    logsig = jax.random.normal(k_x, (batch, input_channels), dtype=jnp.float32)

    ref = reference_forward(logsig, params)

    # Exact path (f32 MXU inputs) -- tight tolerance against the reference.
    out_f32 = multitarget_nrde_forward(
        logsig, params, batch_tile=256, matmul_dtype=jnp.float32
    )
    out_f32 = jax.block_until_ready(out_f32)
    assert out_f32.shape == (batch, 2), out_f32.shape
    assert jnp.allclose(out_f32, ref, atol=1e-5, rtol=1e-5), (out_f32, ref)

    # Fast path (bf16 MXU inputs, f32 accumulation) -- looser tolerance.
    out_bf16 = multitarget_nrde_forward(
        logsig, params, batch_tile=256, matmul_dtype=jnp.bfloat16
    )
    out_bf16 = jax.block_until_ready(out_bf16)
    assert out_bf16.shape == (batch, 2), out_bf16.shape
    assert jnp.allclose(out_bf16, ref, atol=5e-3, rtol=5e-2), (out_bf16, ref)

    print("KERNEL_OK")
</pallas_src>

<mosaic_0001>
module attributes {stable_mosaic.version = 11 : i64} {
  func.func @_nrde_kernel(%arg0: i32, %arg1: memref<8x32xf32, #tpu.memory_space<vmem>>, %arg2: memref<32x64xf32, #tpu.memory_space<vmem>>, %arg3: memref<1x64xf32, #tpu.memory_space<vmem>>, %arg4: memref<64x64xf32, #tpu.memory_space<vmem>>, %arg5: memref<1x64xf32, #tpu.memory_space<vmem>>, %arg6: memref<64x64xf32, #tpu.memory_space<vmem>>, %arg7: memref<1x64xf32, #tpu.memory_space<vmem>>, %arg8: memref<64x2xf32, #tpu.memory_space<vmem>>, %arg9: memref<1x2xf32, #tpu.memory_space<vmem>>, %arg10: memref<8x2xf32, #tpu.memory_space<vmem>>) attributes {dimension_semantics = [#tpu.dimension_semantics<parallel>], iteration_bounds = array<i64: 1>, scalar_prefetch = 0 : i64, scratch_operands = 0 : i64, tpu.core_type = #tpu.core_type<tc>, window_params = [{transform_indices = @transform_0, window_bounds = array<i64: 8, 32>}, {pipeline_mode = #tpu.pipeline_mode<synchronous>, transform_indices = @transform_1, window_bounds = array<i64: 32, 64>}, {pipeline_mode = #tpu.pipeline_mode<synchronous>, transform_indices = @transform_2, window_bounds = array<i64: 1, 64>}, {pipeline_mode = #tpu.pipeline_mode<synchronous>, transform_indices = @transform_3, window_bounds = array<i64: 64, 64>}, {pipeline_mode = #tpu.pipeline_mode<synchronous>, transform_indices = @transform_4, window_bounds = array<i64: 1, 64>}, {pipeline_mode = #tpu.pipeline_mode<synchronous>, transform_indices = @transform_5, window_bounds = array<i64: 64, 64>}, {pipeline_mode = #tpu.pipeline_mode<synchronous>, transform_indices = @transform_6, window_bounds = array<i64: 1, 64>}, {pipeline_mode = #tpu.pipeline_mode<synchronous>, transform_indices = @transform_7, window_bounds = array<i64: 64, 2>}, {pipeline_mode = #tpu.pipeline_mode<synchronous>, transform_indices = @transform_8, window_bounds = array<i64: 1, 2>}, {transform_indices = @transform_9, window_bounds = array<i64: 8, 2>}]} {
    %c0 = arith.constant 0 : index
    %c0_0 = arith.constant 0 : index
    %0 = vector.load %arg1[%c0, %c0_0] : memref<8x32xf32, #tpu.memory_space<vmem>>, vector<8x32xf32>
    %c0_1 = arith.constant 0 : index
    %c0_2 = arith.constant 0 : index
    %1 = vector.load %arg2[%c0_1, %c0_2] : memref<32x64xf32, #tpu.memory_space<vmem>>, vector<32x64xf32>
    %cst = arith.constant dense<0.000000e+00> : vector<8x64xf32>
    %2 = tpu.matmul %0, %1, %cst {dimension_numbers = #tpu.dot_dimension_numbers<[1], [0], [0], [1], [0, 0, 1, 1], [], []>} : vector<8x32xf32>, vector<32x64xf32>, vector<8x64xf32> -> vector<8x64xf32>
    %c0_3 = arith.constant 0 : index
    %c0_4 = arith.constant 0 : index
    %3 = vector.load %arg3[%c0_3, %c0_4] : memref<1x64xf32, #tpu.memory_space<vmem>>, vector<1x64xf32>
    %4 = vector.broadcast %3 : vector<1x64xf32> to vector<8x64xf32>
    %5 = arith.addf %2, %4 : vector<8x64xf32>
    %6 = math.tanh %5 : vector<8x64xf32>
    %c0_5 = arith.constant 0 : index
    %c0_6 = arith.constant 0 : index
    %7 = vector.load %arg4[%c0_5, %c0_6] : memref<64x64xf32, #tpu.memory_space<vmem>>, vector<64x64xf32>
    %cst_7 = arith.constant dense<0.000000e+00> : vector<8x64xf32>
    %8 = tpu.matmul %6, %7, %cst_7 {dimension_numbers = #tpu.dot_dimension_numbers<[1], [0], [0], [1], [0, 0, 1, 1], [], []>} : vector<8x64xf32>, vector<64x64xf32>, vector<8x64xf32> -> vector<8x64xf32>
    %c0_8 = arith.constant 0 : index
    %c0_9 = arith.constant 0 : index
    %9 = vector.load %arg5[%c0_8, %c0_9] : memref<1x64xf32, #tpu.memory_space<vmem>>, vector<1x64xf32>
    %10 = vector.broadcast %9 : vector<1x64xf32> to vector<8x64xf32>
    %11 = arith.addf %8, %10 : vector<8x64xf32>
    %12 = math.tanh %11 : vector<8x64xf32>
    %c0_10 = arith.constant 0 : index
    %c0_11 = arith.constant 0 : index
    %13 = vector.load %arg6[%c0_10, %c0_11] : memref<64x64xf32, #tpu.memory_space<vmem>>, vector<64x64xf32>
    %cst_12 = arith.constant dense<0.000000e+00> : vector<8x64xf32>
    %14 = tpu.matmul %12, %13, %cst_12 {dimension_numbers = #tpu.dot_dimension_numbers<[1], [0], [0], [1], [0, 0, 1, 1], [], []>} : vector<8x64xf32>, vector<64x64xf32>, vector<8x64xf32> -> vector<8x64xf32>
    %c0_13 = arith.constant 0 : index
    %c0_14 = arith.constant 0 : index
    %15 = vector.load %arg7[%c0_13, %c0_14] : memref<1x64xf32, #tpu.memory_space<vmem>>, vector<1x64xf32>
    %16 = vector.broadcast %15 : vector<1x64xf32> to vector<8x64xf32>
    %17 = arith.addf %14, %16 : vector<8x64xf32>
    %18 = math.tanh %17 : vector<8x64xf32>
    %c0_15 = arith.constant 0 : index
    %c0_16 = arith.constant 0 : index
    %19 = vector.load %arg8[%c0_15, %c0_16] : memref<64x2xf32, #tpu.memory_space<vmem>>, vector<64x2xf32>
    %cst_17 = arith.constant dense<0.000000e+00> : vector<8x2xf32>
    %20 = tpu.matmul %18, %19, %cst_17 {dimension_numbers = #tpu.dot_dimension_numbers<[1], [0], [0], [1], [0, 0, 1, 1], [], []>} : vector<8x64xf32>, vector<64x2xf32>, vector<8x2xf32> -> vector<8x2xf32>
    %c0_18 = arith.constant 0 : index
    %c0_19 = arith.constant 0 : index
    %21 = vector.load %arg9[%c0_18, %c0_19] : memref<1x2xf32, #tpu.memory_space<vmem>>, vector<1x2xf32>
    %22 = vector.broadcast %21 : vector<1x2xf32> to vector<8x2xf32>
    %23 = arith.addf %20, %22 : vector<8x2xf32>
    %24 = tpu.weird %23 : vector<8x2xf32> -> vector<8x2xi1>
    %cst_20 = arith.constant dense<true> : vector<8x2xi1>
    %25 = arith.xori %24, %cst_20 : vector<8x2xi1>
    %cst_21 = arith.constant 0.000000e+00 : f32
    %26 = vector.broadcast %cst_21 : f32 to vector<8x2xf32>
    %27 = arith.select %25, %23, %26 : vector<8x2xi1>, vector<8x2xf32>
    %c0_22 = arith.constant 0 : index
    %c0_23 = arith.constant 0 : index
    %28 = vector.load %arg10[%c0_22, %c0_23] : memref<8x2xf32, #tpu.memory_space<vmem>>, vector<8x2xf32>
    tpu.vector_store %arg10[%c0_22, %c0_23], %27 {strides = array<i32>} : memref<8x2xf32, #tpu.memory_space<vmem>>, vector<8x2xf32>,
    return
  }
  func.func @transform_0(%arg0: i32) -> (i32, i32) {
    %c0_i32 = arith.constant 0 : i32
    %c0_i32_0 = arith.constant 0 : i32
    return %arg0, %c0_i32 : i32, i32
  }
  func.func @transform_1(%arg0: i32) -> (i32, i32) {
    %c0_i32 = arith.constant 0 : i32
    %c0_i32_0 = arith.constant 0 : i32
    %c0_i32_1 = arith.constant 0 : i32
    return %c0_i32, %c0_i32_0 : i32, i32
  }
  func.func @transform_2(%arg0: i32) -> (i32, i32) {
    %c0_i32 = arith.constant 0 : i32
    %c0_i32_0 = arith.constant 0 : i32
    %c0_i32_1 = arith.constant 0 : i32
    return %c0_i32, %c0_i32_0 : i32, i32
  }
  func.func @transform_3(%arg0: i32) -> (i32, i32) {
    %c0_i32 = arith.constant 0 : i32
    %c0_i32_0 = arith.constant 0 : i32
    %c0_i32_1 = arith.constant 0 : i32
    return %c0_i32, %c0_i32_0 : i32, i32
  }
  func.func @transform_4(%arg0: i32) -> (i32, i32) {
    %c0_i32 = arith.constant 0 : i32
    %c0_i32_0 = arith.constant 0 : i32
    %c0_i32_1 = arith.constant 0 : i32
    return %c0_i32, %c0_i32_0 : i32, i32
  }
  func.func @transform_5(%arg0: i32) -> (i32, i32) {
    %c0_i32 = arith.constant 0 : i32
    %c0_i32_0 = arith.constant 0 : i32
    %c0_i32_1 = arith.constant 0 : i32
    return %c0_i32, %c0_i32_0 : i32, i32
  }
  func.func @transform_6(%arg0: i32) -> (i32, i32) {
    %c0_i32 = arith.constant 0 : i32
    %c0_i32_0 = arith.constant 0 : i32
    %c0_i32_1 = arith.constant 0 : i32
    return %c0_i32, %c0_i32_0 : i32, i32
  }
  func.func @transform_7(%arg0: i32) -> (i32, i32) {
    %c0_i32 = arith.constant 0 : i32
    %c0_i32_0 = arith.constant 0 : i32
    %c0_i32_1 = arith.constant 0 : i32
    return %c0_i32, %c0_i32_0 : i32, i32
  }
  func.func @transform_8(%arg0: i32) -> (i32, i32) {
    %c0_i32 = arith.constant 0 : i32
    %c0_i32_0 = arith.constant 0 : i32
    %c0_i32_1 = arith.constant 0 : i32
    return %c0_i32, %c0_i32_0 : i32, i32
  }
  func.func @transform_9(%arg0: i32) -> (i32, i32) {
    %c0_i32 = arith.constant 0 : i32
    %c0_i32_0 = arith.constant 0 : i32
    return %arg0, %c0_i32 : i32, i32
  }
}

</mosaic_0001>

<llo_original>
// kernel: tpu_custom_call.1
$region0: #{tpu_custom_call.1}
  #allocation0 [shape = 'u32[]', space=smem, size = 0x4, offset = 0x4, fixed_abs, tag = 'smem constant byte address 0x4 - core index']
  #allocation1 [shape = 'u32[144,128]{1,0:T(1,128)}', space=vmem, size = 0x12000, scoped, tag = 'internal scratch']
  %s0 = inlined_call_operand.hbm [shape: f32[8,32], index: 0, kind: input, shape index: {}]
  %s1 = inlined_call_operand.hbm [shape: f32[32,64], index: 1, kind: input, shape index: {}]
  %s2 = inlined_call_operand.vmem [shape: f32[1,64], index: 2, kind: input, shape index: {}]
  %s3 = inlined_call_operand.vmem [shape: f32[64,64], index: 3, kind: input, shape index: {}]
  %s4 = inlined_call_operand.vmem [shape: f32[1,64], index: 4, kind: input, shape index: {}]
  %s5 = inlined_call_operand.hbm [shape: f32[64,64], index: 5, kind: input, shape index: {}]
  %s6 = inlined_call_operand.vmem [shape: f32[1,64], index: 6, kind: input, shape index: {}]
  %s7 = inlined_call_operand.vmem [shape: f32[64,2], index: 7, kind: input, shape index: {}]
  %s8 = inlined_call_operand.vmem [shape: f32[1,2], index: 8, kind: input, shape index: {}]
  %s9 = inlined_call_operand.vmem [shape: f32[8,2], index: 9, kind: output, shape index: {}]
  %s10 = sld [smem:[#allocation0]]
  $region58: #{tpu_custom_call.1} parent=0
    _
  %s12 = ssub.s32 1, %s10
  %s13 = scalar_select 0, %s12, %s10
  $region1: #{tpu_custom_call.1} parent=0
    #allocation2 [shape = 'u8[4096]{0}', space=vmem, size = 0x1000, scoped, tag = 'input window, operand 0, single buffered']
    #allocation3 [shape = 's32[1]{0}', space=sflag, size = 0x4, scoped, tag = 'scoped memory for tpu_custom_call.1']
    #allocation4 [shape = 'u8[16384]{0}', space=vmem, size = 0x4000, scoped, tag = 'input window, operand 1, single buffered']
    #allocation5 [shape = 's32[1]{0}', space=sflag, size = 0x4, scoped, tag = 'scoped memory for tpu_custom_call.1']
    #allocation6 [shape = 'u8[32768]{0}', space=vmem, size = 0x8000, scoped, tag = 'input window, operand 5, single buffered']
    %14 = vsyncpa [#allocation3], 0
    %15 = vsyncpa [#allocation5], 0
    // Predicated region
    $region2: #{tpu_custom_call.1} parent=1 // pred_check
      _
    $region3: #{tpu_custom_call.1} parent=1 // pred_check_branch
      %17 = sbr.rel (0) target = $region5
    $region4: #{tpu_custom_call.1} parent=1 // pred_region
      %s19 = ssub.s32 128, 128
      %20 = vsyncadd [#allocation3], %s19
      %s22 = sshll.u32 [#allocation2], 4
      %s23 = int_to_ptr.vmem [resolvable:$true] %s22
      %25 = dma.hbm_to_vmem [thread:$0]  %s0, 128, %s23, [#allocation3]
    $region5: #{tpu_custom_call.1} parent=1 // pred_fallthru
      _
    // Predicated region
    $region6: #{tpu_custom_call.1} parent=1 // pred_check
      _
    $region7: #{tpu_custom_call.1} parent=1 // pred_check_branch
      %27 = sbr.rel (0) target = $region9
    $region8: #{tpu_custom_call.1} parent=1 // pred_region
      %s29 = ssub.s32 512, 512
      %30 = vsyncadd [#allocation5], %s29
      %s31 = sshll.u32 [#allocation4], 4
      %s32 = int_to_ptr.vmem [resolvable:$true] %s31
      %37 = dma.hbm_to_vmem [thread:$0]  %s1, 512, %s32, [#allocation5], 128, 128, 8
    $region9: #{tpu_custom_call.1} parent=1 // pred_fallthru
      _
    // Predicated region
    $region10: #{tpu_custom_call.1} parent=1 // pred_check
      _
    $region11: #{tpu_custom_call.1} parent=1 // pred_check_branch
      %39 = sbr.rel (0) target = $region13
    $region12: #{tpu_custom_call.1} parent=1 // pred_region
      _
    $region13: #{tpu_custom_call.1} parent=1 // pred_fallthru
      _
    // Predicated region
    $region14: #{tpu_custom_call.1} parent=1 // pred_check
      _
    $region15: #{tpu_custom_call.1} parent=1 // pred_check_branch
      %41 = sbr.rel (0) target = $region17
    $region16: #{tpu_custom_call.1} parent=1 // pred_region
      _
    $region17: #{tpu_custom_call.1} parent=1 // pred_fallthru
      _
    // Predicated region
    $region18: #{tpu_custom_call.1} parent=1 // pred_check
      _
    $region19: #{tpu_custom_call.1} parent=1 // pred_check_branch
      %43 = sbr.rel (0) target = $region21
    $region20: #{tpu_custom_call.1} parent=1 // pred_region
      _
    $region21: #{tpu_custom_call.1} parent=1 // pred_fallthru
      _
    // Predicated region
    $region22: #{tpu_custom_call.1} parent=1 // pred_check
      _
    $region23: #{tpu_custom_call.1} parent=1 // pred_check_branch
      %45 = sbr.rel (0) target = $region25
    $region24: #{tpu_custom_call.1} parent=1 // pred_region
      %s47 = ssub.s32 1024, 1024
      %48 = vsyncadd [#allocation5], %s47
      %s49 = sshll.u32 [#allocation6], 4
      %s50 = int_to_ptr.vmem [resolvable:$true] %s49
      %55 = dma.hbm_to_vmem [thread:$0]  %s5, 1024, %s50, [#allocation5], 128, 128, 8
    $region25: #{tpu_custom_call.1} parent=1 // pred_fallthru
      _
    // Predicated region
    $region26: #{tpu_custom_call.1} parent=1 // pred_check
      _
    $region27: #{tpu_custom_call.1} parent=1 // pred_check_branch
      %57 = sbr.rel (0) target = $region29
    $region28: #{tpu_custom_call.1} parent=1 // pred_region
      _
    $region29: #{tpu_custom_call.1} parent=1 // pred_fallthru
      _
    // Predicated region
    $region30: #{tpu_custom_call.1} parent=1 // pred_check
      _
    $region31: #{tpu_custom_call.1} parent=1 // pred_check_branch
      %59 = sbr.rel (0) target = $region33
    $region32: #{tpu_custom_call.1} parent=1 // pred_region
      _
    $region33: #{tpu_custom_call.1} parent=1 // pred_fallthru
      _
    // Predicated region
    $region34: #{tpu_custom_call.1} parent=1 // pred_check
      _
    $region35: #{tpu_custom_call.1} parent=1 // pred_check_branch
      %61 = sbr.rel (0) target = $region37
    $region36: #{tpu_custom_call.1} parent=1 // pred_region
      _
    $region37: #{tpu_custom_call.1} parent=1 // pred_fallthru
      _
    // Predicated region
    $region38: #{tpu_custom_call.1} parent=1 // pred_check
      _
    $region39: #{tpu_custom_call.1} parent=1 // pred_check_branch
      %63 = sbr.rel (0) target = $region41
    $region40: #{tpu_custom_call.1} parent=1 // pred_region
      %64 = dma.done [#allocation3], 128
    $region41: #{tpu_custom_call.1} parent=1 // pred_fallthru
      _
    // Predicated region
    $region42: #{tpu_custom_call.1} parent=1 // pred_check
      _
    $region43: #{tpu_custom_call.1} parent=1 // pred_check_branch
      %66 = sbr.rel (0) target = $region45
    $region44: #{tpu_custom_call.1} parent=1 // pred_region
      %67 = dma.done [#allocation5], 512
    $region45: #{tpu_custom_call.1} parent=1 // pred_fallthru
      _
    // Predicated region
    $region46: #{tpu_custom_call.1} parent=1 // pred_check
      _
    $region47: #{tpu_custom_call.1} parent=1 // pred_check_branch
      %69 = sbr.rel (0) target = $region49
    $region48: #{tpu_custom_call.1} parent=1 // pred_region
      %70 = dma.done [#allocation5], 1024
    $region49: #{tpu_custom_call.1} parent=1 // pred_fallthru
      _
    %v71 = vld [vmem:[#allocation2] sm:$0xff]
    %v72 = vld [vmem:[#allocation4] sm:$0xff]
    %v73 = vld [vmem:[#allocation4 + $0x8] sm:$0xff]
    %v74 = vld [vmem:[#allocation4 + $0x10] sm:$0xff]
    %v75 = vld [vmem:[#allocation4 + $0x18] sm:$0xff]
    %v76 = vld [vmem:[%s2] sm:$0x1]
    %v78 = vlaneseq
    %v79 = vshrl.u32 %v78, 7
    %v80 = vsub.s32 0, %v79
    %v81 = vrot.slane %v76, %v80
    %vm83 = vcmask 261120
    %v85 = vsel %vm83, %v71, 0
    %87 = vmatprep.subr.mxu0 0.0
    %88 = vmatpush1.msra.mxu0 0.0
    %89 = vmatprep.subr.mxu0 0.0
    %90 = vmatpush1.msra.mxu0 0.0
    %91 = vmatprep.subr.mxu0 0.0
    %92 = vmatpush1.msra.mxu0 0.0
    %93 = vmatprep.subr.mxu0 0.0
    %94 = vmatpush1.msra.mxu0 0.0
    %95 = vmatprep.subr.mxu0 0.0
    %96 = vmatpush1.msra.mxu0 0.0
    %97 = vmatprep.subr.mxu0 0.0
    %98 = vmatpush1.msra.mxu0 0.0
    %99 = vmatprep.subr.mxu0 0.0
    %100 = vmatpush1.msra.mxu0 0.0
    %101 = vmatprep.subr.mxu0 0.0
    %102 = vmatpush1.msra.mxu0 0.0
    %103 = vmatprep.subr.mxu0 0.0
    %104 = vmatpush1.msra.mxu0 0.0
    %105 = vmatprep.subr.mxu0 0.0
    %106 = vmatpush1.msra.mxu0 0.0
    %107 = vmatprep.subr.mxu0 0.0
    %108 = vmatpush1.msra.mxu0 0.0
    %109 = vmatprep.subr.mxu0 0.0
    %110 = vmatpush1.msra.mxu0 0.0
    %111 = vmatprep.subr.mxu0 0.0
    %112 = vmatpush1.msra.mxu0 %v75
    %113 = vmatprep.subr.mxu0 0.0
    %114 = vmatpush1.msra.mxu0 %v74
    %115 = vmatprep.subr.mxu0 0.0
    %116 = vmatpush1.msra.mxu0 %v73
    %117 = vmatprep.subr.mxu0 0.0
    %118 = vmatpush1.msra.mxu0 %v72
    %119 = vmatprep.subr.mxu0 0.0
    %120 = vmatpush2.msra.mxu0 0.0
    %121 = vmatprep.subr.mxu0 0.0
    %122 = vmatpush2.msra.mxu0 0.0
    %123 = vmatprep.subr.mxu0 0.0
    %124 = vmatpush2.msra.mxu0 0.0
    %125 = vmatprep.subr.mxu0 0.0
    %126 = vmatpush2.msra.mxu0 0.0
    %127 = vmatprep.subr.mxu0 0.0
    %128 = vmatpush2.msra.mxu0 0.0
    %129 = vmatprep.subr.mxu0 0.0
    %130 = vmatpush2.msra.mxu0 0.0
    %131 = vmatprep.subr.mxu0 0.0
    %132 = vmatpush2.msra.mxu0 0.0
    %133 = vmatprep.subr.mxu0 0.0
    %134 = vmatpush2.msra.mxu0 0.0
    %135 = vmatprep.subr.mxu0 0.0
    %136 = vmatpush2.msra.mxu0 0.0
    %137 = vmatprep.subr.mxu0 0.0
    %138 = vmatpush2.msra.mxu0 0.0
    %139 = vmatprep.subr.mxu0 0.0
    %140 = vmatpush2.msra.mxu0 0.0
    %141 = vmatprep.subr.mxu0 0.0
    %142 = vmatpush2.msra.mxu0 0.0
    %143 = vmatprep.subr.mxu0 0.0
    %144 = vmatpush2.msra.mxu0 0.0
    %145 = vmatprep.subr.mxu0 0.0
    %146 = vmatpush2.msra.mxu0 0.0
    %147 = vmatprep.subr.mxu0 0.0
    %148 = vmatpush2.msra.mxu0 0.0
    %149 = vmatprep.subr.mxu0 0.0
    %150 = vmatpush2.msra.mxu0 0.0
    %151 = vmatprep.mubr.f32.mxu0 0.0
    %152 = vmatmul.mubr.f32.gmra.mxu0 %v85
    %v153 = vpop.f32.mrf.mxu0
    %v154 = vadd.f32 %v81, %v153
    %v155 = vpop.f32.mrf.mxu0
    %156 = vdwg.mxu0
    %v157 = vtanh.pop %v154
    %v158 = vld [vmem:[%s3] sm:$0xff]
    %v159 = vld [vmem:[%s3 + $0x8] sm:$0xff]
    %v160 = vld [vmem:[%s3 + $0x10] sm:$0xff]
    %v161 = vld [vmem:[%s3 + $0x18] sm:$0xff]
    %v162 = vld [vmem:[%s3 + $0x20] sm:$0xff]
    %v163 = vld [vmem:[%s3 + $0x28] sm:$0xff]
    %v164 = vld [vmem:[%s3 + $0x30] sm:$0xff]
    %v165 = vld [vmem:[%s3 + $0x38] sm:$0xff]
    %v166 = vld [vmem:[%s4] sm:$0x1]
    %v168 = vlaneseq
    %v169 = vshrl.u32 %v168, 7
    %v170 = vsub.s32 0, %v169
    %v171 = vrot.slane %v166, %v170
    %vm173 = vcmask 523264
    %v175 = vsel %vm173, %v157, 0
    %177 = vmatprep.subr.mxu0 0.0
    %178 = vmatpush1.msra.mxu0 0.0
    %179 = vmatprep.subr.mxu0 0.0
    %180 = vmatpush1.msra.mxu0 0.0
    %181 = vmatprep.subr.mxu0 0.0
    %182 = vmatpush1.msra.mxu0 0.0
    %183 = vmatprep.subr.mxu0 0.0
    %184 = vmatpush1.msra.mxu0 0.0
    %185 = vmatprep.subr.mxu0 0.0
    %186 = vmatpush1.msra.mxu0 0.0
    %187 = vmatprep.subr.mxu0 0.0
    %188 = vmatpush1.msra.mxu0 0.0
    %189 = vmatprep.subr.mxu0 0.0
    %190 = vmatpush1.msra.mxu0 0.0
    %191 = vmatprep.subr.mxu0 0.0
    %192 = vmatpush1.msra.mxu0 0.0
    %193 = vmatprep.subr.mxu0 0.0
    %194 = vmatpush1.msra.mxu0 %v165
    %195 = vmatprep.subr.mxu0 0.0
    %196 = vmatpush1.msra.mxu0 %v164
    %197 = vmatprep.subr.mxu0 0.0
    %198 = vmatpush1.msra.mxu0 %v163
    %199 = vmatprep.subr.mxu0 0.0
    %200 = vmatpush1.msra.mxu0 %v162
    %201 = vmatprep.subr.mxu0 0.0
    %202 = vmatpush1.msra.mxu0 %v161
    %203 = vmatprep.subr.mxu0 0.0
    %204 = vmatpush1.msra.mxu0 %v160
    %205 = vmatprep.subr.mxu0 0.0
    %206 = vmatpush1.msra.mxu0 %v159
    %207 = vmatprep.subr.mxu0 0.0
    %208 = vmatpush1.msra.mxu0 %v158
    %209 = vmatprep.subr.mxu0 0.0
    %210 = vmatpush2.msra.mxu0 0.0
    %211 = vmatprep.subr.mxu0 0.0
    %212 = vmatpush2.msra.mxu0 0.0
    %213 = vmatprep.subr.mxu0 0.0
    %214 = vmatpush2.msra.mxu0 0.0
    %215 = vmatprep.subr.mxu0 0.0
    %216 = vmatpush2.msra.mxu0 0.0
    %217 = vmatprep.subr.mxu0 0.0
    %218 = vmatpush2.msra.mxu0 0.0
    %219 = vmatprep.subr.mxu0 0.0
    %220 = vmatpush2.msra.mxu0 0.0
    %221 = vmatprep.subr.mxu0 0.0
    %222 = vmatpush2.msra.mxu0 0.0
    %223 = vmatprep.subr.mxu0 0.0
    %224 = vmatpush2.msra.mxu0 0.0
    %225 = vmatprep.subr.mxu0 0.0
    %226 = vmatpush2.msra.mxu0 0.0
    %227 = vmatprep.subr.mxu0 0.0
    %228 = vmatpush2.msra.mxu0 0.0
    %229 = vmatprep.subr.mxu0 0.0
    %230 = vmatpush2.msra.mxu0 0.0
    %231 = vmatprep.subr.mxu0 0.0
    %232 = vmatpush2.msra.mxu0 0.0
    %233 = vmatprep.subr.mxu0 0.0
    %234 = vmatpush2.msra.mxu0 0.0
    %235 = vmatprep.subr.mxu0 0.0
    %236 = vmatpush2.msra.mxu0 0.0
    %237 = vmatprep.subr.mxu0 0.0
    %238 = vmatpush2.msra.mxu0 0.0
    %239 = vmatprep.subr.mxu0 0.0
    %240 = vmatpush2.msra.mxu0 0.0
    %241 = vmatprep.mubr.f32.mxu0 0.0
    %242 = vmatmul.mubr.f32.gmra.mxu0 %v175
    %v243 = vpop.f32.mrf.mxu0
    %v244 = vadd.f32 %v171, %v243
    %v245 = vpop.f32.mrf.mxu0
    %246 = vdwg.mxu0
    %v247 = vtanh.pop %v244
    %v248 = vld [vmem:[#allocation6] sm:$0xff]
    %v249 = vld [vmem:[#allocation6 + $0x8] sm:$0xff]
    %v250 = vld [vmem:[#allocation6 + $0x10] sm:$0xff]
    %v251 = vld [vmem:[#allocation6 + $0x18] sm:$0xff]
    %v252 = vld [vmem:[#allocation6 + $0x20] sm:$0xff]
    %v253 = vld [vmem:[#allocation6 + $0x28] sm:$0xff]
    %v254 = vld [vmem:[#allocation6 + $0x30] sm:$0xff]
    %v255 = vld [vmem:[#allocation6 + $0x38] sm:$0xff]
    %v256 = vld [vmem:[%s6] sm:$0x1]
    %v258 = vlaneseq
    %v259 = vshrl.u32 %v258, 7
    %v260 = vsub.s32 0, %v259
    %v261 = vrot.slane %v256, %v260
    %v264 = vsel %vm173, %v247, 0
    %266 = vmatprep.subr.mxu0 0.0
    %267 = vmatpush1.msra.mxu0 0.0
    %268 = vmatprep.subr.mxu0 0.0
    %269 = vmatpush1.msra.mxu0 0.0
    %270 = vmatprep.subr.mxu0 0.0
    %271 = vmatpush1.msra.mxu0 0.0
    %272 = vmatprep.subr.mxu0 0.0
    %273 = vmatpush1.msra.mxu0 0.0
    %274 = vmatprep.subr.mxu0 0.0
    %275 = vmatpush1.msra.mxu0 0.0
    %276 = vmatprep.subr.mxu0 0.0
    %277 = vmatpush1.msra.mxu0 0.0
    %278 = vmatprep.subr.mxu0 0.0
    %279 = vmatpush1.msra.mxu0 0.0
    %280 = vmatprep.subr.mxu0 0.0
    %281 = vmatpush1.msra.mxu0 0.0
    %282 = vmatprep.subr.mxu0 0.0
    %283 = vmatpush1.msra.mxu0 %v255
    %284 = vmatprep.subr.mxu0 0.0
    %285 = vmatpush1.msra.mxu0 %v254
    %286 = vmatprep.subr.mxu0 0.0
    %287 = vmatpush1.msra.mxu0 %v253
    %288 = vmatprep.subr.mxu0 0.0
    %289 = vmatpush1.msra.mxu0 %v252
    %290 = vmatprep.subr.mxu0 0.0
    %291 = vmatpush1.msra.mxu0 %v251
    %292 = vmatprep.subr.mxu0 0.0
    %293 = vmatpush1.msra.mxu0 %v250
    %294 = vmatprep.subr.mxu0 0.0
    %295 = vmatpush1.msra.mxu0 %v249
    %296 = vmatprep.subr.mxu0 0.0
    %297 = vmatpush1.msra.mxu0 %v248
    %298 = vmatprep.subr.mxu0 0.0
    %299 = vmatpush2.msra.mxu0 0.0
    %300 = vmatprep.subr.mxu0 0.0
    %301 = vmatpush2.msra.mxu0 0.0
    %302 = vmatprep.subr.mxu0 0.0
    %303 = vmatpush2.msra.mxu0 0.0
    %304 = vmatprep.subr.mxu0 0.0
    %305 = vmatpush2.msra.mxu0 0.0
    %306 = vmatprep.subr.mxu0 0.0
    %307 = vmatpush2.msra.mxu0 0.0
    %308 = vmatprep.subr.mxu0 0.0
    %309 = vmatpush2.msra.mxu0 0.0
    %310 = vmatprep.subr.mxu0 0.0
    %311 = vmatpush2.msra.mxu0 0.0
    %312 = vmatprep.subr.mxu0 0.0
    %313 = vmatpush2.msra.mxu0 0.0
    %314 = vmatprep.subr.mxu0 0.0
    %315 = vmatpush2.msra.mxu0 0.0
    %316 = vmatprep.subr.mxu0 0.0
    %317 = vmatpush2.msra.mxu0 0.0
    %318 = vmatprep.subr.mxu0 0.0
    %319 = vmatpush2.msra.mxu0 0.0
    %320 = vmatprep.subr.mxu0 0.0
    %321 = vmatpush2.msra.mxu0 0.0
    %322 = vmatprep.subr.mxu0 0.0
    %323 = vmatpush2.msra.mxu0 0.0
    %324 = vmatprep.subr.mxu0 0.0
    %325 = vmatpush2.msra.mxu0 0.0
    %326 = vmatprep.subr.mxu0 0.0
    %327 = vmatpush2.msra.mxu0 0.0
    %328 = vmatprep.subr.mxu0 0.0
    %329 = vmatpush2.msra.mxu0 0.0
    %330 = vmatprep.mubr.f32.mxu0 0.0
    %331 = vmatmul.mubr.f32.gmra.mxu0 %v264
    %v332 = vpop.f32.mrf.mxu0
    %v333 = vadd.f32 %v261, %v332
    %v334 = vpop.f32.mrf.mxu0
    %335 = vdwg.mxu0
    %v336 = vtanh.pop %v333
    %v337 = vld [vmem:[%s7] sm:$0xff]
    %v338 = vld [vmem:[%s7 + $0x8] sm:$0xff]
    %v339 = vld [vmem:[%s7 + $0x10] sm:$0xff]
    %v340 = vld [vmem:[%s7 + $0x18] sm:$0xff]
    %v341 = vld [vmem:[%s7 + $0x20] sm:$0xff]
    %v342 = vld [vmem:[%s7 + $0x28] sm:$0xff]
    %v343 = vld [vmem:[%s7 + $0x30] sm:$0xff]
    %v344 = vld [vmem:[%s7 + $0x38] sm:$0xff]
    %v345 = vld [vmem:[%s8] sm:$0x1]
    %v347 = vlaneseq
    %v348 = vshrl.u32 %v347, 7
    %v349 = vsub.s32 0, %v348
    %v350 = vrot.slane %v345, %v349
    %v353 = vsel %vm173, %v336, 0
    %355 = vmatprep.subr.mxu0 0.0
    %356 = vmatpush1.msra.mxu0 0.0
    %357 = vmatprep.subr.mxu0 0.0
    %358 = vmatpush1.msra.mxu0 0.0
    %359 = vmatprep.subr.mxu0 0.0
    %360 = vmatpush1.msra.mxu0 0.0
    %361 = vmatprep.subr.mxu0 0.0
    %362 = vmatpush1.msra.mxu0 0.0
    %363 = vmatprep.subr.mxu0 0.0
    %364 = vmatpush1.msra.mxu0 0.0
    %365 = vmatprep.subr.mxu0 0.0
    %366 = vmatpush1.msra.mxu0 0.0
    %367 = vmatprep.subr.mxu0 0.0
    %368 = vmatpush1.msra.mxu0 0.0
    %369 = vmatprep.subr.mxu0 0.0
    %370 = vmatpush1.msra.mxu0 0.0
    %371 = vmatprep.subr.mxu0 0.0
    %372 = vmatpush1.msra.mxu0 %v344
    %373 = vmatprep.subr.mxu0 0.0
    %374 = vmatpush1.msra.mxu0 %v343
    %375 = vmatprep.subr.mxu0 0.0
    %376 = vmatpush1.msra.mxu0 %v342
    %377 = vmatprep.subr.mxu0 0.0
    %378 = vmatpush1.msra.mxu0 %v341
    %379 = vmatprep.subr.mxu0 0.0
    %380 = vmatpush1.msra.mxu0 %v340
    %381 = vmatprep.subr.mxu0 0.0
    %382 = vmatpush1.msra.mxu0 %v339
    %383 = vmatprep.subr.mxu0 0.0
    %384 = vmatpush1.msra.mxu0 %v338
    %385 = vmatprep.subr.mxu0 0.0
    %386 = vmatpush1.msra.mxu0 %v337
    %387 = vmatprep.subr.mxu0 0.0
    %388 = vmatpush2.msra.mxu0 0.0
    %389 = vmatprep.subr.mxu0 0.0
    %390 = vmatpush2.msra.mxu0 0.0
    %391 = vmatprep.subr.mxu0 0.0
    %392 = vmatpush2.msra.mxu0 0.0
    %393 = vmatprep.subr.mxu0 0.0
    %394 = vmatpush2.msra.mxu0 0.0
    %395 = vmatprep.subr.mxu0 0.0
    %396 = vmatpush2.msra.mxu0 0.0
    %397 = vmatprep.subr.mxu0 0.0
    %398 = vmatpush2.msra.mxu0 0.0
    %399 = vmatprep.subr.mxu0 0.0
    %400 = vmatpush2.msra.mxu0 0.0
    %401 = vmatprep.subr.mxu0 0.0
    %402 = vmatpush2.msra.mxu0 0.0
    %403 = vmatprep.subr.mxu0 0.0
    %404 = vmatpush2.msra.mxu0 0.0
    %405 = vmatprep.subr.mxu0 0.0
    %406 = vmatpush2.msra.mxu0 0.0
    %407 = vmatprep.subr.mxu0 0.0
    %408 = vmatpush2.msra.mxu0 0.0
    %409 = vmatprep.subr.mxu0 0.0
    %410 = vmatpush2.msra.mxu0 0.0
    %411 = vmatprep.subr.mxu0 0.0
    %412 = vmatpush2.msra.mxu0 0.0
    %413 = vmatprep.subr.mxu0 0.0
    %414 = vmatpush2.msra.mxu0 0.0
    %415 = vmatprep.subr.mxu0 0.0
    %416 = vmatpush2.msra.mxu0 0.0
    %417 = vmatprep.subr.mxu0 0.0
    %418 = vmatpush2.msra.mxu0 0.0
    %419 = vmatprep.mubr.f32.mxu0 0.0
    %420 = vmatmul.mubr.f32.gmra.mxu0 %v353
    %v421 = vpop.f32.mrf.mxu0
    %v422 = vadd.f32 %v350, %v421
    %v423 = vpop.f32.mrf.mxu0
    %424 = vdwg.mxu0
    %vm425 = vweird.f32 %v422
    %vm426 = vmxor %vm425, 1
    %v427 = vsel %vm426, %v422, 0.0
    %vm428 = vcmask 15360
    %429 = vst.msk [vmem:[%s9] sm:$0xff] %vm428, %v427
    // Predicated region
    $region50: #{tpu_custom_call.1} parent=1 // pred_check
      _
    $region51: #{tpu_custom_call.1} parent=1 // pred_check_branch
      %431 = sbr.rel (0) target = $region53
    $region52: #{tpu_custom_call.1} parent=1 // pred_region
      _
    $region53: #{tpu_custom_call.1} parent=1 // pred_fallthru
      _
    // Predicated region
    $region54: #{tpu_custom_call.1} parent=1 // pred_check
      _
    $region55: #{tpu_custom_call.1} parent=1 // pred_check_branch
      %433 = sbr.rel (0) target = $region57
    $region56: #{tpu_custom_call.1} parent=1 // pred_region
      _
    $region57: #{tpu_custom_call.1} parent=1 // pred_fallthru
      _
    %434 = vsyncpa [#allocation3], 1
    %435 = vsyncpa [#allocation5], 1

</llo_original>
